<compile_context>
chip_gen: v7x
topology: tpu7x:2x2x1
jax: 0.10.0
libtpu: 0.0.40
codegen_flags: <defaults>
</compile_context>

<pallas_src>
import functools

import jax
import jax.numpy as jnp
from jax.experimental import pallas as pl
from jax.experimental.pallas import tpu as pltpu


def _round_up(x, m):
    return (x + m - 1) // m * m


def _upscale_conv_kernel(x_ref, w_ref, b_ref, o_ref, *, W, HW_pad, pad_left,
                         imgs_per_step):
    """3x3 'same' conv for `imgs_per_step` images as ONE fused MXU GEMM.

    x_ref: (B_t, Cin, L)       flattened images, zero lane-padding both sides
    w_ref: (Co4, 9*Cin)        per-tap weights folded into K (K = tap*Cin + cin)
    b_ref: (Co4, 1)            f32 bias column
    o_ref: (B_t, Co4, HW_pad)  conv output, lane-dense spatial axis
    """
    # Column masks for horizontal 'same' padding (hoisted, once per grid step).
    lane = jax.lax.broadcasted_iota(jnp.int32, (1, HW_pad), 1)
    col = lane % W
    not_first_col = col != 0          # valid lanes for taps with dw == -1
    not_last_col = col != (W - 1)     # valid lanes for taps with dw == +1

    # im2col along K: 9 static lane-shifted slices stacked along sublanes
    # (taps), images concatenated along lanes -> one (9*Cin, B_t*HW_pad) RHS.
    # Slices are masked/concatenated in f32 (unpacked layout), then cast to
    # the bf16 compute dtype just before the dot.
    taps = [(kh - 1, kw - 1) for kh in range(3) for kw in range(3)]
    rows = []
    for dh, dw in taps:
        start = pad_left + dh * W + dw                # static Python int
        shards = []
        for b in range(imgs_per_step):
            xs = x_ref[b, :, start:start + HW_pad].astype(jnp.float32)
            if dw == -1:
                xs = jnp.where(not_first_col, xs, 0.0)
            elif dw == 1:
                xs = jnp.where(not_last_col, xs, 0.0)
            shards.append(xs)
        rows.append(shards[0] if imgs_per_step == 1
                    else jnp.concatenate(shards, axis=-1))
    rhs = jnp.concatenate(rows, axis=0).astype(w_ref.dtype)

    # Single GEMM: bf16-in / f32-acc MXU fast path (no Precision.HIGHEST, no
    # loop-carried accumulator across 9 tiny-K dots).
    acc = jnp.dot(w_ref[...], rhs, preferred_element_type=jnp.float32)
    acc = acc + b_ref[...]                            # bias broadcast over lanes

    for b in range(imgs_per_step):
        o_ref[b] = acc[:, b * HW_pad:(b + 1) * HW_pad].astype(o_ref.dtype)


def upscale_block_forward(x, weight, bias, *, out_channels, scale=2,
                          images_per_step=1, compute_dtype=jnp.bfloat16):
    """Forward pass of UpscaleBlock.

    x:      (N, Cin, H, W)
    weight: (out_channels*scale*2, Cin, 3, 3)   (PyTorch Conv2d OIHW layout)
    bias:   (out_channels*scale*2,)
    returns (N, out_channels, H*scale, W*scale), dtype of x
    """
    if scale != 2:
        # The module's view() only reshapes cleanly when scale*2 == scale*scale.
        raise NotImplementedError("UpscaleBlock only supports scale=2")

    N, Cin, H, W = x.shape
    Co4 = out_channels * scale * 2
    assert weight.shape == (Co4, Cin, 3, 3)
    assert bias.shape == (Co4,)
    assert N % images_per_step == 0, "images_per_step must divide the batch"
    B_t = images_per_step

    HW = H * W
    HW_pad = _round_up(HW, 128)               # lane-dense output stores
    pad_left = W + 1
    L = _round_up(HW_pad + 2 * (W + 1), 128)
    pad_right = L - pad_left - HW

    # Flatten spatial to the lane axis, cast to the MXU compute dtype and add
    # >= W+1 zero lanes on each side so every 3x3 tap is a static lane slice.
    x_flat = jnp.pad(x.reshape(N, Cin, HW).astype(compute_dtype),
                     ((0, 0), (0, 0), (pad_left, pad_right)))

    # Reorder conv output channels (s0, s1, oc) -> (oc, s0, s1) so the post-
    # kernel permute is a plain depth-to-space, then fold the 3x3 taps into
    # the contraction dim: row = co, K index = (kh*3 + kw)*Cin + cin.
    w_perm = jnp.transpose(
        weight.reshape(scale, scale, out_channels, Cin, 3, 3),
        (2, 0, 1, 3, 4, 5)).reshape(Co4, Cin, 3, 3)
    b_perm = jnp.transpose(bias.reshape(scale, scale, out_channels),
                           (2, 0, 1)).reshape(Co4)
    w_fused = jnp.transpose(w_perm, (0, 2, 3, 1)).reshape(Co4, 9 * Cin)
    w_fused = w_fused.astype(compute_dtype)
    b_col = b_perm.reshape(Co4, 1).astype(jnp.float32)

    kernel = functools.partial(_upscale_conv_kernel, W=W, HW_pad=HW_pad,
                               pad_left=pad_left, imgs_per_step=B_t)

    conv_flat = pl.pallas_call(
        kernel,
        out_shape=jax.ShapeDtypeStruct((N, Co4, HW_pad), x.dtype),
        grid_spec=pltpu.PrefetchScalarGridSpec(
            num_scalar_prefetch=0,
            grid=(N // B_t,),
            in_specs=[
                pl.BlockSpec((B_t, Cin, L), lambda n: (n, 0, 0)),
                pl.BlockSpec((Co4, 9 * Cin), lambda n: (0, 0)),
                pl.BlockSpec((Co4, 1), lambda n: (0, 0)),
            ],
            out_specs=pl.BlockSpec((B_t, Co4, HW_pad), lambda n: (n, 0, 0)),
        ),
        compiler_params=pltpu.CompilerParams(
            dimension_semantics=("parallel",),
            vmem_limit_bytes=32 * 1024 * 1024,
        ),
    )(x_flat, w_fused, b_col)

    # Depth-to-space (the module's view/permute/reshape) — pure layout,
    # left to XLA on the lane-dense, channel-pre-permuted kernel output.
    conv = conv_flat[..., :HW].reshape(N, out_channels, scale, scale, H, W)
    out = jnp.transpose(conv, (0, 1, 4, 2, 5, 3))
    return out.reshape(N, out_channels, H * scale, W * scale)


if __name__ == "__main__":
    key = jax.random.PRNGKey(0)
    k_x, k_w, k_b = jax.random.split(key, 3)

    N, Cin, H, W = 4, 4, 16, 16
    out_channels, scale = 8, 2
    Co4 = out_channels * scale * 2

    x = jax.random.normal(k_x, (N, Cin, H, W), dtype=jnp.float32)
    weight = jax.random.normal(k_w, (Co4, Cin, 3, 3), dtype=jnp.float32) * 0.1
    bias = jax.random.normal(k_b, (Co4,), dtype=jnp.float32) * 0.1

    out = upscale_block_forward(x, weight, bias, out_channels=out_channels,
                                scale=scale, images_per_step=2)
    out = jax.block_until_ready(out)

    # Pure-JAX reference mirroring the PyTorch forward.  The kernel computes
    # with bf16 inputs / f32 accumulation, so the reference uses the same
    # bf16-rounded operands (products are then exact in f32; only the
    # accumulation order differs).
    x_q = x.astype(jnp.bfloat16).astype(jnp.float32)
    w_q = weight.astype(jnp.bfloat16).astype(jnp.float32)
    conv_ref = jax.lax.conv_general_dilated(
        x_q, w_q, window_strides=(1, 1), padding="SAME",
        dimension_numbers=("NCHW", "OIHW", "NCHW"),
        precision=jax.lax.Precision.HIGHEST,
    ) + bias[None, :, None, None]
    ref = conv_ref.reshape(N, scale, scale, out_channels, H, W)
    ref = jnp.transpose(ref, (0, 3, 4, 1, 5, 2))
    ref = ref.reshape(N, out_channels, H * scale, W * scale)

    assert out.shape == (N, out_channels, H * scale, W * scale), out.shape
    assert out.dtype == x.dtype
    max_err = float(jnp.max(jnp.abs(out - ref)))
    assert jnp.allclose(out, ref, atol=5e-3, rtol=5e-3), max_err

    print("KERNEL_OK")
</pallas_src>

<mosaic_0001>
module attributes {stable_mosaic.version = 11 : i64} {
  func.func @_upscale_conv_kernel(%arg0: i32, %arg1: memref<2x4x384xbf16, #tpu.memory_space<vmem>>, %arg2: memref<32x36xbf16, #tpu.memory_space<vmem>>, %arg3: memref<32x1xf32, #tpu.memory_space<vmem>>, %arg4: memref<2x32x256xf32, #tpu.memory_space<vmem>>) attributes {dimension_semantics = [#tpu.dimension_semantics<parallel>], iteration_bounds = array<i64: 2>, scalar_prefetch = 0 : i64, scratch_operands = 0 : i64, tpu.core_type = #tpu.core_type<tc>, window_params = [{transform_indices = @transform_0, window_bounds = array<i64: 2, 4, 384>}, {pipeline_mode = #tpu.pipeline_mode<synchronous>, transform_indices = @transform_1, window_bounds = array<i64: 32, 36>}, {pipeline_mode = #tpu.pipeline_mode<synchronous>, transform_indices = @transform_2, window_bounds = array<i64: 32, 1>}, {transform_indices = @transform_3, window_bounds = array<i64: 2, 32, 256>}]} {
    %0 = tpu.iota {dimensions = array<i32: 1>} : vector<1x256xi32>
    %c16_i32 = arith.constant 16 : i32
    %c0_i32 = arith.constant 0 : i32
    %1 = arith.cmpi eq, %c16_i32, %c0_i32 : i32
    %c1_i32 = arith.constant 1 : i32
    %2 = arith.select %1, %c1_i32, %c16_i32 : i32
    %3 = vector.broadcast %2 : i32 to vector<1x256xi32>
    %4 = arith.remsi %0, %3 : vector<1x256xi32>
    %c0_i32_0 = arith.constant 0 : i32
    %5 = vector.broadcast %c0_i32_0 : i32 to vector<1x256xi32>
    %6 = arith.cmpi ne, %4, %5 : vector<1x256xi32>
    %c0_i32_1 = arith.constant 0 : i32
    %7 = vector.broadcast %c0_i32_1 : i32 to vector<1x256xi32>
    %8 = arith.cmpi slt, %4, %7 : vector<1x256xi32>
    %c0_i32_2 = arith.constant 0 : i32
    %9 = arith.cmpi slt, %2, %c0_i32_2 : i32
    %10 = vector.broadcast %9 : i1 to vector<1x256xi1>
    %11 = vector.broadcast %10 : vector<1x256xi1> to vector<1x256xi1>
    %12 = arith.xori %8, %11 : vector<1x256xi1>
    %13 = arith.andi %12, %6 : vector<1x256xi1>
    %14 = vector.broadcast %2 : i32 to vector<1x256xi32>
    %15 = arith.addi %4, %14 : vector<1x256xi32>
    %16 = arith.select %13, %15, %4 : vector<1x256xi1>, vector<1x256xi32>
    %c0_i32_3 = arith.constant 0 : i32
    %17 = vector.broadcast %c0_i32_3 : i32 to vector<1x256xi32>
    %18 = arith.cmpi ne, %16, %17 : vector<1x256xi32>
    %c15_i32 = arith.constant 15 : i32
    %19 = vector.broadcast %c15_i32 : i32 to vector<1x256xi32>
    %20 = arith.cmpi ne, %16, %19 : vector<1x256xi32>
    %c0 = arith.constant 0 : index
    %c0_4 = arith.constant 0 : index
    %c0_5 = arith.constant 0 : index
    %21 = vector.load %arg1[%c0, %c0_4, %c0_5] : memref<2x4x384xbf16, #tpu.memory_space<vmem>>, vector<1x4x256xbf16>
    %22 = vector.shape_cast %21 : vector<1x4x256xbf16> to vector<4x256xbf16>
    %23 = arith.extf %22 : vector<4x256xbf16> to vector<4x256xf32>
    %cst = arith.constant 0.000000e+00 : f32
    %24 = vector.shape_cast %18 : vector<1x256xi1> to vector<1x256xi1>
    %25 = vector.broadcast %24 : vector<1x256xi1> to vector<4x256xi1>
    %26 = vector.broadcast %cst : f32 to vector<4x256xf32>
    %27 = arith.select %25, %23, %26 : vector<4x256xi1>, vector<4x256xf32>
    %c1 = arith.constant 1 : index
    %c0_6 = arith.constant 0 : index
    %c0_7 = arith.constant 0 : index
    %28 = vector.load %arg1[%c1, %c0_6, %c0_7] : memref<2x4x384xbf16, #tpu.memory_space<vmem>>, vector<1x4x256xbf16>
    %29 = vector.shape_cast %28 : vector<1x4x256xbf16> to vector<4x256xbf16>
    %30 = arith.extf %29 : vector<4x256xbf16> to vector<4x256xf32>
    %cst_8 = arith.constant 0.000000e+00 : f32
    %31 = vector.shape_cast %18 : vector<1x256xi1> to vector<1x256xi1>
    %32 = vector.broadcast %31 : vector<1x256xi1> to vector<4x256xi1>
    %33 = vector.broadcast %cst_8 : f32 to vector<4x256xf32>
    %34 = arith.select %32, %30, %33 : vector<4x256xi1>, vector<4x256xf32>
    %35 = tpu.concatenate %27, %34 in 1 : vector<4x256xf32>, vector<4x256xf32> -> vector<4x512xf32>
    %c0_9 = arith.constant 0 : index
    %c0_10 = arith.constant 0 : index
    %c1_11 = arith.constant 1 : index
    %36 = vector.load %arg1[%c0_9, %c0_10, %c1_11] : memref<2x4x384xbf16, #tpu.memory_space<vmem>>, vector<1x4x256xbf16>
    %37 = vector.shape_cast %36 : vector<1x4x256xbf16> to vector<4x256xbf16>
    %38 = arith.extf %37 : vector<4x256xbf16> to vector<4x256xf32>
    %c1_12 = arith.constant 1 : index
    %c0_13 = arith.constant 0 : index
    %c1_14 = arith.constant 1 : index
    %39 = vector.load %arg1[%c1_12, %c0_13, %c1_14] : memref<2x4x384xbf16, #tpu.memory_space<vmem>>, vector<1x4x256xbf16>
    %40 = vector.shape_cast %39 : vector<1x4x256xbf16> to vector<4x256xbf16>
    %41 = arith.extf %40 : vector<4x256xbf16> to vector<4x256xf32>
    %42 = tpu.concatenate %38, %41 in 1 : vector<4x256xf32>, vector<4x256xf32> -> vector<4x512xf32>
    %c0_15 = arith.constant 0 : index
    %c0_16 = arith.constant 0 : index
    %c2 = arith.constant 2 : index
    %43 = vector.load %arg1[%c0_15, %c0_16, %c2] : memref<2x4x384xbf16, #tpu.memory_space<vmem>>, vector<1x4x256xbf16>
    %44 = vector.shape_cast %43 : vector<1x4x256xbf16> to vector<4x256xbf16>
    %45 = arith.extf %44 : vector<4x256xbf16> to vector<4x256xf32>
    %cst_17 = arith.constant 0.000000e+00 : f32
    %46 = vector.shape_cast %20 : vector<1x256xi1> to vector<1x256xi1>
    %47 = vector.broadcast %46 : vector<1x256xi1> to vector<4x256xi1>
    %48 = vector.broadcast %cst_17 : f32 to vector<4x256xf32>
    %49 = arith.select %47, %45, %48 : vector<4x256xi1>, vector<4x256xf32>
    %c1_18 = arith.constant 1 : index
    %c0_19 = arith.constant 0 : index
    %c2_20 = arith.constant 2 : index
    %50 = vector.load %arg1[%c1_18, %c0_19, %c2_20] : memref<2x4x384xbf16, #tpu.memory_space<vmem>>, vector<1x4x256xbf16>
    %51 = vector.shape_cast %50 : vector<1x4x256xbf16> to vector<4x256xbf16>
    %52 = arith.extf %51 : vector<4x256xbf16> to vector<4x256xf32>
    %cst_21 = arith.constant 0.000000e+00 : f32
    %53 = vector.shape_cast %20 : vector<1x256xi1> to vector<1x256xi1>
    %54 = vector.broadcast %53 : vector<1x256xi1> to vector<4x256xi1>
    %55 = vector.broadcast %cst_21 : f32 to vector<4x256xf32>
    %56 = arith.select %54, %52, %55 : vector<4x256xi1>, vector<4x256xf32>
    %57 = tpu.concatenate %49, %56 in 1 : vector<4x256xf32>, vector<4x256xf32> -> vector<4x512xf32>
    %c0_22 = arith.constant 0 : index
    %c0_23 = arith.constant 0 : index
    %c16 = arith.constant 16 : index
    %58 = vector.load %arg1[%c0_22, %c0_23, %c16] : memref<2x4x384xbf16, #tpu.memory_space<vmem>>, vector<1x4x256xbf16>
    %59 = vector.shape_cast %58 : vector<1x4x256xbf16> to vector<4x256xbf16>
    %60 = arith.extf %59 : vector<4x256xbf16> to vector<4x256xf32>
    %cst_24 = arith.constant 0.000000e+00 : f32
    %61 = vector.shape_cast %18 : vector<1x256xi1> to vector<1x256xi1>
    %62 = vector.broadcast %61 : vector<1x256xi1> to vector<4x256xi1>
    %63 = vector.broadcast %cst_24 : f32 to vector<4x256xf32>
    %64 = arith.select %62, %60, %63 : vector<4x256xi1>, vector<4x256xf32>
    %c1_25 = arith.constant 1 : index
    %c0_26 = arith.constant 0 : index
    %c16_27 = arith.constant 16 : index
    %65 = vector.load %arg1[%c1_25, %c0_26, %c16_27] : memref<2x4x384xbf16, #tpu.memory_space<vmem>>, vector<1x4x256xbf16>
    %66 = vector.shape_cast %65 : vector<1x4x256xbf16> to vector<4x256xbf16>
    %67 = arith.extf %66 : vector<4x256xbf16> to vector<4x256xf32>
    %cst_28 = arith.constant 0.000000e+00 : f32
    %68 = vector.shape_cast %18 : vector<1x256xi1> to vector<1x256xi1>
    %69 = vector.broadcast %68 : vector<1x256xi1> to vector<4x256xi1>
    %70 = vector.broadcast %cst_28 : f32 to vector<4x256xf32>
    %71 = arith.select %69, %67, %70 : vector<4x256xi1>, vector<4x256xf32>
    %72 = tpu.concatenate %64, %71 in 1 : vector<4x256xf32>, vector<4x256xf32> -> vector<4x512xf32>
    %c0_29 = arith.constant 0 : index
    %c0_30 = arith.constant 0 : index
    %c17 = arith.constant 17 : index
    %73 = vector.load %arg1[%c0_29, %c0_30, %c17] : memref<2x4x384xbf16, #tpu.memory_space<vmem>>, vector<1x4x256xbf16>
    %74 = vector.shape_cast %73 : vector<1x4x256xbf16> to vector<4x256xbf16>
    %75 = arith.extf %74 : vector<4x256xbf16> to vector<4x256xf32>
    %c1_31 = arith.constant 1 : index
    %c0_32 = arith.constant 0 : index
    %c17_33 = arith.constant 17 : index
    %76 = vector.load %arg1[%c1_31, %c0_32, %c17_33] : memref<2x4x384xbf16, #tpu.memory_space<vmem>>, vector<1x4x256xbf16>
    %77 = vector.shape_cast %76 : vector<1x4x256xbf16> to vector<4x256xbf16>
    %78 = arith.extf %77 : vector<4x256xbf16> to vector<4x256xf32>
    %79 = tpu.concatenate %75, %78 in 1 : vector<4x256xf32>, vector<4x256xf32> -> vector<4x512xf32>
    %c0_34 = arith.constant 0 : index
    %c0_35 = arith.constant 0 : index
    %c18 = arith.constant 18 : index
    %80 = vector.load %arg1[%c0_34, %c0_35, %c18] : memref<2x4x384xbf16, #tpu.memory_space<vmem>>, vector<1x4x256xbf16>
    %81 = vector.shape_cast %80 : vector<1x4x256xbf16> to vector<4x256xbf16>
    %82 = arith.extf %81 : vector<4x256xbf16> to vector<4x256xf32>
    %cst_36 = arith.constant 0.000000e+00 : f32
    %83 = vector.shape_cast %20 : vector<1x256xi1> to vector<1x256xi1>
    %84 = vector.broadcast %83 : vector<1x256xi1> to vector<4x256xi1>
    %85 = vector.broadcast %cst_36 : f32 to vector<4x256xf32>
    %86 = arith.select %84, %82, %85 : vector<4x256xi1>, vector<4x256xf32>
    %c1_37 = arith.constant 1 : index
    %c0_38 = arith.constant 0 : index
    %c18_39 = arith.constant 18 : index
    %87 = vector.load %arg1[%c1_37, %c0_38, %c18_39] : memref<2x4x384xbf16, #tpu.memory_space<vmem>>, vector<1x4x256xbf16>
    %88 = vector.shape_cast %87 : vector<1x4x256xbf16> to vector<4x256xbf16>
    %89 = arith.extf %88 : vector<4x256xbf16> to vector<4x256xf32>
    %cst_40 = arith.constant 0.000000e+00 : f32
    %90 = vector.shape_cast %20 : vector<1x256xi1> to vector<1x256xi1>
    %91 = vector.broadcast %90 : vector<1x256xi1> to vector<4x256xi1>
    %92 = vector.broadcast %cst_40 : f32 to vector<4x256xf32>
    %93 = arith.select %91, %89, %92 : vector<4x256xi1>, vector<4x256xf32>
    %94 = tpu.concatenate %86, %93 in 1 : vector<4x256xf32>, vector<4x256xf32> -> vector<4x512xf32>
    %c0_41 = arith.constant 0 : index
    %c0_42 = arith.constant 0 : index
    %c32 = arith.constant 32 : index
    %95 = vector.load %arg1[%c0_41, %c0_42, %c32] : memref<2x4x384xbf16, #tpu.memory_space<vmem>>, vector<1x4x256xbf16>
    %96 = vector.shape_cast %95 : vector<1x4x256xbf16> to vector<4x256xbf16>
    %97 = arith.extf %96 : vector<4x256xbf16> to vector<4x256xf32>
    %cst_43 = arith.constant 0.000000e+00 : f32
    %98 = vector.shape_cast %18 : vector<1x256xi1> to vector<1x256xi1>
    %99 = vector.broadcast %98 : vector<1x256xi1> to vector<4x256xi1>
    %100 = vector.broadcast %cst_43 : f32 to vector<4x256xf32>
    %101 = arith.select %99, %97, %100 : vector<4x256xi1>, vector<4x256xf32>
    %c1_44 = arith.constant 1 : index
    %c0_45 = arith.constant 0 : index
    %c32_46 = arith.constant 32 : index
    %102 = vector.load %arg1[%c1_44, %c0_45, %c32_46] : memref<2x4x384xbf16, #tpu.memory_space<vmem>>, vector<1x4x256xbf16>
    %103 = vector.shape_cast %102 : vector<1x4x256xbf16> to vector<4x256xbf16>
    %104 = arith.extf %103 : vector<4x256xbf16> to vector<4x256xf32>
    %cst_47 = arith.constant 0.000000e+00 : f32
    %105 = vector.shape_cast %18 : vector<1x256xi1> to vector<1x256xi1>
    %106 = vector.broadcast %105 : vector<1x256xi1> to vector<4x256xi1>
    %107 = vector.broadcast %cst_47 : f32 to vector<4x256xf32>
    %108 = arith.select %106, %104, %107 : vector<4x256xi1>, vector<4x256xf32>
    %109 = tpu.concatenate %101, %108 in 1 : vector<4x256xf32>, vector<4x256xf32> -> vector<4x512xf32>
    %c0_48 = arith.constant 0 : index
    %c0_49 = arith.constant 0 : index
    %c33 = arith.constant 33 : index
    %110 = vector.load %arg1[%c0_48, %c0_49, %c33] : memref<2x4x384xbf16, #tpu.memory_space<vmem>>, vector<1x4x256xbf16>
    %111 = vector.shape_cast %110 : vector<1x4x256xbf16> to vector<4x256xbf16>
    %112 = arith.extf %111 : vector<4x256xbf16> to vector<4x256xf32>
    %c1_50 = arith.constant 1 : index
    %c0_51 = arith.constant 0 : index
    %c33_52 = arith.constant 33 : index
    %113 = vector.load %arg1[%c1_50, %c0_51, %c33_52] : memref<2x4x384xbf16, #tpu.memory_space<vmem>>, vector<1x4x256xbf16>
    %114 = vector.shape_cast %113 : vector<1x4x256xbf16> to vector<4x256xbf16>
    %115 = arith.extf %114 : vector<4x256xbf16> to vector<4x256xf32>
    %116 = tpu.concatenate %112, %115 in 1 : vector<4x256xf32>, vector<4x256xf32> -> vector<4x512xf32>
    %c0_53 = arith.constant 0 : index
    %c0_54 = arith.constant 0 : index
    %c34 = arith.constant 34 : index
    %117 = vector.load %arg1[%c0_53, %c0_54, %c34] : memref<2x4x384xbf16, #tpu.memory_space<vmem>>, vector<1x4x256xbf16>
    %118 = vector.shape_cast %117 : vector<1x4x256xbf16> to vector<4x256xbf16>
    %119 = arith.extf %118 : vector<4x256xbf16> to vector<4x256xf32>
    %cst_55 = arith.constant 0.000000e+00 : f32
    %120 = vector.shape_cast %20 : vector<1x256xi1> to vector<1x256xi1>
    %121 = vector.broadcast %120 : vector<1x256xi1> to vector<4x256xi1>
    %122 = vector.broadcast %cst_55 : f32 to vector<4x256xf32>
    %123 = arith.select %121, %119, %122 : vector<4x256xi1>, vector<4x256xf32>
    %c1_56 = arith.constant 1 : index
    %c0_57 = arith.constant 0 : index
    %c34_58 = arith.constant 34 : index
    %124 = vector.load %arg1[%c1_56, %c0_57, %c34_58] : memref<2x4x384xbf16, #tpu.memory_space<vmem>>, vector<1x4x256xbf16>
    %125 = vector.shape_cast %124 : vector<1x4x256xbf16> to vector<4x256xbf16>
    %126 = arith.extf %125 : vector<4x256xbf16> to vector<4x256xf32>
    %cst_59 = arith.constant 0.000000e+00 : f32
    %127 = vector.shape_cast %20 : vector<1x256xi1> to vector<1x256xi1>
    %128 = vector.broadcast %127 : vector<1x256xi1> to vector<4x256xi1>
    %129 = vector.broadcast %cst_59 : f32 to vector<4x256xf32>
    %130 = arith.select %128, %126, %129 : vector<4x256xi1>, vector<4x256xf32>
    %131 = tpu.concatenate %123, %130 in 1 : vector<4x256xf32>, vector<4x256xf32> -> vector<4x512xf32>
    %132 = tpu.concatenate %35, %42, %57, %72, %79, %94, %109, %116, %131 in 0 : vector<4x512xf32>, vector<4x512xf32>, vector<4x512xf32>, vector<4x512xf32>, vector<4x512xf32>, vector<4x512xf32>, vector<4x512xf32>, vector<4x512xf32>, vector<4x512xf32> -> vector<36x512xf32>
    %133 = arith.truncf %132 : vector<36x512xf32> to vector<36x512xbf16>
    %c0_60 = arith.constant 0 : index
    %c0_61 = arith.constant 0 : index
    %134 = vector.load %arg2[%c0_60, %c0_61] : memref<32x36xbf16, #tpu.memory_space<vmem>>, vector<32x36xbf16>
    %cst_62 = arith.constant dense<0.000000e+00> : vector<32x512xf32>
    %135 = tpu.matmul %134, %133, %cst_62 {dimension_numbers = #tpu.dot_dimension_numbers<[1], [0], [0], [1], [0, 0, 1, 1], [], []>} : vector<32x36xbf16>, vector<36x512xbf16>, vector<32x512xf32> -> vector<32x512xf32>
    %c0_63 = arith.constant 0 : index
    %c0_64 = arith.constant 0 : index
    %136 = vector.load %arg3[%c0_63, %c0_64] : memref<32x1xf32, #tpu.memory_space<vmem>>, vector<32x1xf32>
    %137 = vector.broadcast %136 : vector<32x1xf32> to vector<32x512xf32>
    %138 = arith.addf %135, %137 : vector<32x512xf32>
    %139 = vector.extract_strided_slice %138 {offsets = [0, 0], sizes = [32, 256], strides = [1, 1]} : vector<32x512xf32> to vector<32x256xf32>
    %c0_65 = arith.constant 0 : index
    %c0_66 = arith.constant 0 : index
    %c0_67 = arith.constant 0 : index
    %140 = vector.load %arg4[%c0_65, %c0_66, %c0_67] : memref<2x32x256xf32, #tpu.memory_space<vmem>>, vector<1x32x256xf32>
    %141 = vector.shape_cast %140 : vector<1x32x256xf32> to vector<32x256xf32>
    %142 = vector.shape_cast %139 : vector<32x256xf32> to vector<1x32x256xf32>
    tpu.vector_store %arg4[%c0_65, %c0_66, %c0_67], %142 {strides = array<i32>} : memref<2x32x256xf32, #tpu.memory_space<vmem>>, vector<1x32x256xf32>,
    %143 = vector.extract_strided_slice %138 {offsets = [0, 256], sizes = [32, 256], strides = [1, 1]} : vector<32x512xf32> to vector<32x256xf32>
    %c1_68 = arith.constant 1 : index
    %c0_69 = arith.constant 0 : index
    %c0_70 = arith.constant 0 : index
    %144 = vector.load %arg4[%c1_68, %c0_69, %c0_70] : memref<2x32x256xf32, #tpu.memory_space<vmem>>, vector<1x32x256xf32>
    %145 = vector.shape_cast %144 : vector<1x32x256xf32> to vector<32x256xf32>
    %146 = vector.shape_cast %143 : vector<32x256xf32> to vector<1x32x256xf32>
    tpu.vector_store %arg4[%c1_68, %c0_69, %c0_70], %146 {strides = array<i32>} : memref<2x32x256xf32, #tpu.memory_space<vmem>>, vector<1x32x256xf32>,
    return
  }
  func.func @transform_0(%arg0: i32) -> (i32, i32, i32) {
    %c0_i32 = arith.constant 0 : i32
    %c0_i32_0 = arith.constant 0 : i32
    %c0_i32_1 = arith.constant 0 : i32
    return %arg0, %c0_i32, %c0_i32_0 : i32, i32, i32
  }
  func.func @transform_1(%arg0: i32) -> (i32, i32) {
    %c0_i32 = arith.constant 0 : i32
    %c0_i32_0 = arith.constant 0 : i32
    %c0_i32_1 = arith.constant 0 : i32
    return %c0_i32, %c0_i32_0 : i32, i32
  }
  func.func @transform_2(%arg0: i32) -> (i32, i32) {
    %c0_i32 = arith.constant 0 : i32
    %c0_i32_0 = arith.constant 0 : i32
    %c0_i32_1 = arith.constant 0 : i32
    return %c0_i32, %c0_i32_0 : i32, i32
  }
  func.func @transform_3(%arg0: i32) -> (i32, i32, i32) {
    %c0_i32 = arith.constant 0 : i32
    %c0_i32_0 = arith.constant 0 : i32
    %c0_i32_1 = arith.constant 0 : i32
    return %arg0, %c0_i32, %c0_i32_0 : i32, i32, i32
  }
}

</mosaic_0001>

<llo_original>
// kernel: tpu_custom_call.1
$region0: #{tpu_custom_call.1}
  #allocation0 [shape = 'u32[]', space=smem, size = 0x4, offset = 0x4, fixed_abs, tag = 'smem constant byte address 0x4 - core index']
  #allocation1 [shape = 'u32[144,128]{1,0:T(1,128)}', space=vmem, size = 0x12000, scoped, tag = 'internal scratch']
  %s0 = inlined_call_operand.vmem [shape: bf16[4,4,384], index: 0, kind: input, shape index: {}]
  %s1 = inlined_call_operand.hbm [shape: bf16[32,36], index: 1, kind: input, shape index: {}]
  %s2 = inlined_call_operand.vmem [shape: f32[32,1], index: 2, kind: input, shape index: {}]
  %s3 = inlined_call_operand.hbm [shape: f32[4,32,256], index: 3, kind: output, shape index: {}]
  %s4 = sld [smem:[#allocation0]]
  $region49: #{tpu_custom_call.1} parent=0
    _
  %s6 = ssub.s32 1, %s4
  %s7 = scalar_select 0, %s6, %s4
  $region1: #{tpu_custom_call.1} parent=0
    #allocation2 [shape = 'u8[8192]{0}', space=vmem, size = 0x2000, scoped, tag = 'input window, operand 1, single buffered']
    #allocation3 [shape = 's32[2]{0}', space=sflag, size = 0x8, scoped, tag = 'scoped memory for tpu_custom_call.1']
    #allocation4 [shape = 's32[2]{0}', space=sflag, size = 0x8, scoped, tag = 'scoped memory for tpu_custom_call.1']
    #allocation5 [shape = 'u8[131072]{0}', space=vmem, size = 0x20000, scoped, tag = 'output window, operand 0']
    %8 = vsyncpa [#allocation3], 0
    %9 = vsyncpa [#allocation4], 0
    %s10 = scalar_lea.sflag [#allocation4], 1
    %11 = vsyncpa %s10, 0
    loop: start=0, step=1, limit=4
    $region2: #{tpu_custom_call.1} parent=1 // loop_pre_header
      _
    $region3: #{tpu_custom_call.1} parent=1 // loop_header
      %s13 = sphi 0, %s17
      %p14 = scmp.ge.s32.totalorder %s13, 4
      %s23 = sphi 0, %s25
      %s26 = sphi 0, %s23
      %s27 = sphi 0, %s26
      %s43 = sphi 0, %s27
      %s47 = sphi 0, %s47
      %s49 = sphi 0, %s47
      %s50 = sphi 0, %s49
      %s64 = sphi 0, %s50
      %s68 = sphi 0, %s68
      %s70 = sphi 0, %s68
      %s71 = sphi 0, %s70
      %s85 = sphi 0, %s71
      %s91 = sphi 0, %s93
      %s94 = sphi 0, %s91
      %s95 = sphi 0, %s94
      %s111 = sphi 0, %s95
    $region4: #{tpu_custom_call.1} parent=1 // loop_header_branch
      %16 = sbr.rel (%p14) target = $region8
    $region5: #{tpu_custom_call.1} parent=1 // loop_body
      %s18 = ssub.s32 %s13, 1
      %s19 = ssub.s32 %s13, 2
      %s20 = sadd.s32 %s13, 1
      %s21 = ssub.s32 %s13, %s20
      %p22 = scmp.eq.s32.totalorder %s21, 0
      %s24 = sadd.s32 %s23, 1
      %s25 = scalar_select %p22, %s23, %s24
      %p28 = pneg %p22
      %p29 = scmp.eq.s32.totalorder %s13, 1
      %p30 = por %p28, %p29
      %p31 = scmp.ne.s32.totalorder %s23, %s26
      %p32 = scmp.eq.s32.totalorder %s13, 0
      %p33 = por %p31, %p32
      %p34 = scmp.ne.s32.totalorder %s23, %s26
      %p35 = scmp.eq.s32.totalorder %s18, 1
      %p36 = por %p34, %p35
      %p37 = scmp.ne.s32.totalorder %s26, %s27
      %p38 = scmp.eq.s32.totalorder %s18, 0
      %p39 = por %p37, %p38
      %p40 = scmp.ne.s32.totalorder %s26, %s27
      %p41 = scmp.eq.s32.totalorder %s19, 1
      %p42 = por %p40, %p41
      %p44 = scmp.ne.s32.totalorder %s27, %s43
      %p45 = scmp.eq.s32.totalorder %s19, 0
      %p46 = por %p44, %p45
      %s48 = sadd.s32 %s47, 1
      %p51 = scmp.eq.s32.totalorder %s13, 1
      %p52 = scmp.ne.s32.totalorder %s47, %s49
      %p53 = scmp.eq.s32.totalorder %s13, 0
      %p54 = por %p52, %p53
      %p55 = scmp.ne.s32.totalorder %s47, %s49
      %p56 = scmp.eq.s32.totalorder %s18, 1
      %p57 = por %p55, %p56
      %p58 = scmp.ne.s32.totalorder %s49, %s50
      %p59 = scmp.eq.s32.totalorder %s18, 0
      %p60 = por %p58, %p59
      %p61 = scmp.ne.s32.totalorder %s49, %s50
      %p62 = scmp.eq.s32.totalorder %s19, 1
      %p63 = por %p61, %p62
      %p65 = scmp.ne.s32.totalorder %s50, %s64
      %p66 = scmp.eq.s32.totalorder %s19, 0
      %p67 = por %p65, %p66
      %s69 = sadd.s32 %s68, 1
      %p72 = scmp.eq.s32.totalorder %s13, 1
      %p73 = scmp.ne.s32.totalorder %s68, %s70
      %p74 = scmp.eq.s32.totalorder %s13, 0
      %p75 = por %p73, %p74
      %p76 = scmp.ne.s32.totalorder %s68, %s70
      %p77 = scmp.eq.s32.totalorder %s18, 1
      %p78 = por %p76, %p77
      %p79 = scmp.ne.s32.totalorder %s70, %s71
      %p80 = scmp.eq.s32.totalorder %s18, 0
      %p81 = por %p79, %p80
      %p82 = scmp.ne.s32.totalorder %s70, %s71
      %p83 = scmp.eq.s32.totalorder %s19, 1
      %p84 = por %p82, %p83
      %p86 = scmp.ne.s32.totalorder %s71, %s85
      %p87 = scmp.eq.s32.totalorder %s19, 0
      %p88 = por %p86, %p87
      %s89 = ssub.s32 %s13, %s20
      %p90 = scmp.eq.s32.totalorder %s89, 0
      %s92 = sadd.s32 %s91, 1
      %s93 = scalar_select %p90, %s91, %s92
      %p96 = pneg %p90
      %p97 = scmp.eq.s32.totalorder %s13, 1
      %p98 = por %p96, %p97
      %p99 = scmp.ne.s32.totalorder %s91, %s94
      %p100 = scmp.eq.s32.totalorder %s13, 0
      %p101 = por %p99, %p100
      %p102 = scmp.ne.s32.totalorder %s91, %s94
      %p103 = scmp.eq.s32.totalorder %s18, 1
      %p104 = por %p102, %p103
      %p105 = scmp.ne.s32.totalorder %s94, %s95
      %p106 = scmp.eq.s32.totalorder %s18, 0
      %p107 = por %p105, %p106
      %p108 = scmp.ne.s32.totalorder %s94, %s95
      %p109 = scmp.eq.s32.totalorder %s19, 1
      %p110 = por %p108, %p109
      %p112 = scmp.ne.s32.totalorder %s95, %s111
      %p113 = scmp.eq.s32.totalorder %s19, 0
      %p114 = por %p112, %p113
      %p115 = scmp.le.s32.totalorder 1, %s13
      %p116 = scmp.lt.s32.totalorder %s13, 3
      %p117 = pnand %p115, %p116
      %p118 = pneg %p117
      // Predicated region
      $region9: #{tpu_custom_call.1} parent=5 // pred_check
        _
      $region10: #{tpu_custom_call.1} parent=5 // pred_check_branch
        %120 = sbr.rel (%p117) target = $region12
      $region11: #{tpu_custom_call.1} parent=5 // pred_region
        %s121 = ssub.s32 %s13, 1
        // Predicated region
        $region13: #{tpu_custom_call.1} parent=11 // pred_check
          %p122 = pneg %p60
        $region14: #{tpu_custom_call.1} parent=11 // pred_check_branch
          %124 = sbr.rel (%p122) target = $region16
        $region15: #{tpu_custom_call.1} parent=11 // pred_region
          %s126 = ssub.s32 256, 256
          %127 = vsyncadd [#allocation3], %s126
          %s128 = sshll.u32 [#allocation2], 4
          %s129 = int_to_ptr.vmem [resolvable:$true] %s128
          %134 = dma.hbm_to_vmem [thread:$0]  %s1, 256, %s129, [#allocation3], 64, 64, 4
        $region16: #{tpu_custom_call.1} parent=11 // pred_fallthru
          _
        // Predicated region
        $region17: #{tpu_custom_call.1} parent=11 // pred_check
          %p135 = pneg %p81
        $region18: #{tpu_custom_call.1} parent=11 // pred_check_branch
          %137 = sbr.rel (%p135) target = $region20
        $region19: #{tpu_custom_call.1} parent=11 // pred_region
          _
        $region20: #{tpu_custom_call.1} parent=11 // pred_fallthru
          _
      $region12: #{tpu_custom_call.1} parent=5 // pred_fallthru
        _
      %p138 = scmp.lt.s32.totalorder %s13, 2
      // Predicated region
      $region21: #{tpu_custom_call.1} parent=5 // pred_check
        %p139 = pneg %p138
      $region22: #{tpu_custom_call.1} parent=5 // pred_check_branch
        %141 = sbr.rel (%p139) target = $region24
      $region23: #{tpu_custom_call.1} parent=5 // pred_region
        // Predicated region
        $region25: #{tpu_custom_call.1} parent=23 // pred_check
          %p142 = pneg %p33
        $region26: #{tpu_custom_call.1} parent=23 // pred_check_branch
          %144 = sbr.rel (%p142) target = $region28
        $region27: #{tpu_custom_call.1} parent=23 // pred_region
          %s145 = smul.u32 2, %s13
          %p146 = scmp.lt.s32.totalorder %s145, 3
          %s147 = scalar_select %p146, %s145, 3
          %s148 = smul.addr %s147, 3
          %s149 = smul.addr %s148, 2
          %s150 = scalar_lea.vmem %s0, %s149
          %s151 = smul.u32 2, %s13
        $region28: #{tpu_custom_call.1} parent=23 // pred_fallthru
          _
      $region24: #{tpu_custom_call.1} parent=5 // pred_fallthru
        _
      %p152 = scmp.le.s32.totalorder 1, %s13
      %p153 = scmp.lt.s32.totalorder %s13, 3
      %p154 = pnand %p152, %p153
      %p155 = pneg %p154
      // Predicated region
      $region29: #{tpu_custom_call.1} parent=5 // pred_check
        _
      $region30: #{tpu_custom_call.1} parent=5 // pred_check_branch
        %157 = sbr.rel (%p154) target = $region32
      $region31: #{tpu_custom_call.1} parent=5 // pred_region
        %s158 = ssub.s32 %s13, 1
        // Predicated region
        $region33: #{tpu_custom_call.1} parent=31 // pred_check
          %p159 = pneg %p60
        $region34: #{tpu_custom_call.1} parent=31 // pred_check_branch
          %161 = sbr.rel (%p159) target = $region36
        $region35: #{tpu_custom_call.1} parent=31 // pred_region
          %162 = dma.done [#allocation3], 256
        $region36: #{tpu_custom_call.1} parent=31 // pred_fallthru
          _
        %s163 = smul.u32 2, %s18
        %p164 = scmp.lt.s32.totalorder %s163, 3
        %s165 = scalar_select %p164, %s163, 3
        %s166 = smul.addr %s165, 3
        %s167 = smul.addr %s166, 2
        %s168 = scalar_lea.vmem %s0, %s167
        %p169 = pneg %p39
        %p170 = pneg %p36
        %p171 = pneg %p60
        %p172 = pneg %p57
        %p173 = pneg %p81
        %p174 = pneg %p78
        %p175 = pneg %p107
        %p176 = pneg %p104
        %s177 = sand.u32 %s94, 1
        %s178 = scalar_lea.sflag [#allocation4], %s177
        %s179 = sand.u32 %s94, 1
        %s180 = smul.addr %s179, 128
        %s181 = scalar_lea.vmem [#allocation5], %s180
        %s182 = smul.u32 2, %s18
        %p183 = scmp.lt.s32.totalorder %s182, 3
        %s184 = scalar_select %p183, %s182, 3
        %s185 = smul.addr %s184, 3
        %s186 = smul.addr %s185, 2
        %s187 = scalar_lea.vmem %s0, %s186
        %s188 = smul.u32 2, %s18
        %s189 = smul.u32 2, %s18
        %v191 = vlaneseq
        %v192 = vand.u32 %v191, 127
        %v193 = vadd.s32 %v192, 128
        %vm194 = vcmp.lt.s32.totalorder %v192, 0
        %v195 = vsub.s32 0, %v192
        %v196 = vsel %vm194, %v195, %v192
        %v197 = vshrl.u32 %v196, 4
        %v198 = vand.u32 %v196, 15
        %v199 = vsub.s32 0, %v198
        %v200 = vsel %vm194, %v199, %v198
        %vm201 = vcmp.lt.s32.totalorder %v193, 0
        %v202 = vsub.s32 0, %v193
        %v203 = vsel %vm201, %v202, %v193
        %v204 = vshrl.u32 %v203, 4
        %v205 = vand.u32 %v203, 15
        %v206 = vsub.s32 0, %v205
        %v207 = vsel %vm201, %v206, %v205
        %vm208 = vcmp.ne.s32.totalorder %v200, 0
        %vm209 = vcmp.ne.s32.totalorder %v207, 0
        %vm210 = vcmp.lt.s32.totalorder %v200, 0
        %vm211 = vcmp.lt.s32.totalorder %v207, 0
        %vm212 = vmand %vm210, %vm208
        %vm213 = vmand %vm211, %vm209
        %v214 = vadd.s32 %v200, 16
        %v215 = vadd.s32 %v207, 16
        %v216 = vsel %vm212, %v214, %v200
        %v217 = vsel %vm213, %v215, %v207
        %vm218 = vcmp.ne.s32.totalorder %v216, 0
        %vm219 = vcmp.ne.s32.totalorder %v217, 0
        %vm220 = vcmp.ne.s32.totalorder %v216, 15
        %vm221 = vcmp.ne.s32.totalorder %v217, 15
        %v222 = vld [vmem:[%s187] sm:$0xf]
        %v223 = vunpack.c.l.bf16 %v222
        %v224 = vsel %vm218, 1, 0
        %v225 = vsel %vm219, 1, 0
        %vm226 = vcmp.eq.s32.totalorder %v224, 1
        %vm227 = vcmp.eq.s32.totalorder %v225, 1
        %v229 = vcombine.high %v223, %v223
        %v231 = vsel %vm226, %v223, 0.0
        %v232 = vsel %vm227, %v229, 0.0
        %s233 = scalar_lea.vmem %s187, 6
        %v234 = vld [vmem:[%s233] sm:$0xf]
        %v235 = vunpack.c.l.bf16 %v234
        %v237 = vcombine.high %v235, %v235
        %v239 = vsel %vm226, %v235, 0.0
        %v240 = vsel %vm227, %v237, 0.0
        %v241 = vld [vmem:[%s187] sm:$0x3f]
        %v242 = vunpack.c.l.bf16 %v241
        %v243 = vunpack.c.h.bf16 %v241
        %v244 = vld [vmem:[%s233] sm:$0x3f]
        %v245 = vunpack.c.l.bf16 %v244
        %v246 = vunpack.c.h.bf16 %v244
        %v249 = vcombine.high %v242, %v242
        %250 = vrot.lane.b32.xlu0 %v242, 127
        %v251 = vpop.permute.xlu0 %250
        %252 = vrot.lane.b32.xlu0 %v249, 127
        %v253 = vpop.permute.xlu0 %252
        %254 = vrot.lane.b32.xlu0 %v243, 127
        %v255 = vpop.permute.xlu0 %254
        %vm256 = vcmask 1039360
        %v257 = vsel %vm256, %v251, %v253
        %v258 = vsel %vm256, %v253, %v255
        %v261 = vcombine.high %v245, %v245
        %262 = vrot.lane.b32.xlu0 %v245, 127
        %v263 = vpop.permute.xlu0 %262
        %264 = vrot.lane.b32.xlu0 %v261, 127
        %v265 = vpop.permute.xlu0 %264
        %266 = vrot.lane.b32.xlu0 %v246, 127
        %v267 = vpop.permute.xlu0 %266
        %v268 = vsel %vm256, %v263, %v265
        %v269 = vsel %vm256, %v265, %v267
        %v270 = vsel %vm220, 1, 0
        %v271 = vsel %vm221, 1, 0
        %vm272 = vcmp.eq.s32.totalorder %v270, 1
        %vm273 = vcmp.eq.s32.totalorder %v271, 1
        %274 = vrot.lane.b32.xlu0 %v242, 126
        %v275 = vpop.permute.xlu0 %274
        %276 = vrot.lane.b32.xlu0 %v249, 126
        %v277 = vpop.permute.xlu0 %276
        %278 = vrot.lane.b32.xlu0 %v243, 126
        %v279 = vpop.permute.xlu0 %278
        %vm280 = vcmask 1031168
        %v281 = vsel %vm280, %v275, %v277
        %v282 = vsel %vm280, %v277, %v279
        %v285 = vsel %vm272, %v281, 0.0
        %v286 = vsel %vm273, %v282, 0.0
        %287 = vrot.lane.b32.xlu0 %v245, 126
        %v288 = vpop.permute.xlu0 %287
        %289 = vrot.lane.b32.xlu0 %v261, 126
        %v290 = vpop.permute.xlu0 %289
        %291 = vrot.lane.b32.xlu0 %v246, 126
        %v292 = vpop.permute.xlu0 %291
        %v293 = vsel %vm280, %v288, %v290
        %v294 = vsel %vm280, %v290, %v292
        %v297 = vsel %vm272, %v293, 0.0
        %v298 = vsel %vm273, %v294, 0.0
        %299 = vrot.lane.b32.xlu0 %v242, 112
        %v300 = vpop.permute.xlu0 %299
        %301 = vrot.lane.b32.xlu0 %v249, 112
        %v302 = vpop.permute.xlu0 %301
        %303 = vrot.lane.b32.xlu0 %v243, 112
        %v304 = vpop.permute.xlu0 %303
        %vm305 = vcmask 916480
        %v306 = vsel %vm305, %v300, %v302
        %v307 = vsel %vm305, %v302, %v304
        %v310 = vsel %vm226, %v306, 0.0
        %v311 = vsel %vm227, %v307, 0.0
        %312 = vrot.lane.b32.xlu0 %v245, 112
        %v313 = vpop.permute.xlu0 %312
        %314 = vrot.lane.b32.xlu0 %v261, 112
        %v315 = vpop.permute.xlu0 %314
        %316 = vrot.lane.b32.xlu0 %v246, 112
        %v317 = vpop.permute.xlu0 %316
        %v318 = vsel %vm305, %v313, %v315
        %v319 = vsel %vm305, %v315, %v317
        %v322 = vsel %vm226, %v318, 0.0
        %v323 = vsel %vm227, %v319, 0.0
        %324 = vrot.lane.b32.xlu0 %v242, 111
        %v325 = vpop.permute.xlu0 %324
        %326 = vrot.lane.b32.xlu0 %v249, 111
        %v327 = vpop.permute.xlu0 %326
        %328 = vrot.lane.b32.xlu0 %v243, 111
        %v329 = vpop.permute.xlu0 %328
        %vm330 = vcmask 908288
        %v331 = vsel %vm330, %v325, %v327
        %v332 = vsel %vm330, %v327, %v329
        %335 = vrot.lane.b32.xlu0 %v245, 111
        %v336 = vpop.permute.xlu0 %335
        %337 = vrot.lane.b32.xlu0 %v261, 111
        %v338 = vpop.permute.xlu0 %337
        %339 = vrot.lane.b32.xlu0 %v246, 111
        %v340 = vpop.permute.xlu0 %339
        %v341 = vsel %vm330, %v336, %v338
        %v342 = vsel %vm330, %v338, %v340
        %345 = vrot.lane.b32.xlu0 %v242, 110
        %v346 = vpop.permute.xlu0 %345
        %347 = vrot.lane.b32.xlu0 %v249, 110
        %v348 = vpop.permute.xlu0 %347
        %349 = vrot.lane.b32.xlu0 %v243, 110
        %v350 = vpop.permute.xlu0 %349
        %vm351 = vcmask 900096
        %v352 = vsel %vm351, %v346, %v348
        %v353 = vsel %vm351, %v348, %v350
        %v356 = vsel %vm272, %v352, 0.0
        %v357 = vsel %vm273, %v353, 0.0
        %358 = vrot.lane.b32.xlu0 %v245, 110
        %v359 = vpop.permute.xlu0 %358
        %360 = vrot.lane.b32.xlu0 %v261, 110
        %v361 = vpop.permute.xlu0 %360
        %362 = vrot.lane.b32.xlu0 %v246, 110
        %v363 = vpop.permute.xlu0 %362
        %v364 = vsel %vm351, %v359, %v361
        %v365 = vsel %vm351, %v361, %v363
        %v368 = vsel %vm272, %v364, 0.0
        %v369 = vsel %vm273, %v365, 0.0
        %370 = vrot.lane.b32.xlu0 %v242, 96
        %v371 = vpop.permute.xlu0 %370
        %372 = vrot.lane.b32.xlu0 %v249, 96
        %v373 = vpop.permute.xlu0 %372
        %374 = vrot.lane.b32.xlu0 %v243, 96
        %v375 = vpop.permute.xlu0 %374
        %vm376 = vcmask 785408
        %v377 = vsel %vm376, %v371, %v373
        %v378 = vsel %vm376, %v373, %v375
        %v381 = vsel %vm226, %v377, 0.0
        %v382 = vsel %vm227, %v378, 0.0
        %383 = vrot.lane.b32.xlu0 %v245, 96
        %v384 = vpop.permute.xlu0 %383
        %385 = vrot.lane.b32.xlu0 %v261, 96
        %v386 = vpop.permute.xlu0 %385
        %387 = vrot.lane.b32.xlu0 %v246, 96
        %v388 = vpop.permute.xlu0 %387
        %v389 = vsel %vm376, %v384, %v386
        %v390 = vsel %vm376, %v386, %v388
        %v393 = vsel %vm226, %v389, 0.0
        %v394 = vsel %vm227, %v390, 0.0
        %395 = vrot.lane.b32.xlu0 %v242, 95
        %v396 = vpop.permute.xlu0 %395
        %397 = vrot.lane.b32.xlu0 %v249, 95
        %v398 = vpop.permute.xlu0 %397
        %399 = vrot.lane.b32.xlu0 %v243, 95
        %v400 = vpop.permute.xlu0 %399
        %vm401 = vcmask 777216
        %v402 = vsel %vm401, %v396, %v398
        %v403 = vsel %vm401, %v398, %v400
        %404 = vrot.lane.b32.xlu0 %v245, 95
        %v405 = vpop.permute.xlu0 %404
        %406 = vrot.lane.b32.xlu0 %v261, 95
        %v407 = vpop.permute.xlu0 %406
        %408 = vrot.lane.b32.xlu0 %v246, 95
        %v409 = vpop.permute.xlu0 %408
        %v410 = vsel %vm401, %v405, %v407
        %v411 = vsel %vm401, %v407, %v409
        %412 = vrot.lane.b32.xlu0 %v242, 94
        %v413 = vpop.permute.xlu0 %412
        %414 = vrot.lane.b32.xlu0 %v249, 94
        %v415 = vpop.permute.xlu0 %414
        %416 = vrot.lane.b32.xlu0 %v243, 94
        %v417 = vpop.permute.xlu0 %416
        %vm418 = vcmask 769024
        %v419 = vsel %vm418, %v413, %v415
        %v420 = vsel %vm418, %v415, %v417
        %v423 = vsel %vm272, %v419, 0.0
        %v424 = vsel %vm273, %v420, 0.0
        %425 = vrot.lane.b32.xlu0 %v245, 94
        %v426 = vpop.permute.xlu0 %425
        %427 = vrot.lane.b32.xlu0 %v261, 94
        %v428 = vpop.permute.xlu0 %427
        %429 = vrot.lane.b32.xlu0 %v246, 94
        %v430 = vpop.permute.xlu0 %429
        %v431 = vsel %vm418, %v426, %v428
        %v432 = vsel %vm418, %v428, %v430
        %v435 = vsel %vm272, %v431, 0.0
        %v436 = vsel %vm273, %v432, 0.0
        %v437 = vrot.slane %v257, 4
        %v438 = vrot.slane %v258, 4
        %v439 = vrot.slane %v268, 4
        %v440 = vrot.slane %v269, 4
        %v449 = vrot.slane %v310, 4
        %v450 = vrot.slane %v311, 4
        %v451 = vrot.slane %v322, 4
        %v452 = vrot.slane %v323, 4
        %v461 = vrot.slane %v356, 4
        %v462 = vrot.slane %v357, 4
        %v463 = vrot.slane %v368, 4
        %v464 = vrot.slane %v369, 4
        %v469 = vrot.slane %v402, 4
        %v470 = vrot.slane %v403, 4
        %v471 = vrot.slane %v410, 4
        %v472 = vrot.slane %v411, 4
        %vm477 = vcmask 1043456
        %v478 = vsel %vm477, %v231, %v437
        %v479 = vsel %vm477, %v232, %v438
        %v480 = vsel %vm477, %v239, %v439
        %v481 = vsel %vm477, %v240, %v440
        %v482 = vsel %vm477, %v285, %v449
        %v483 = vsel %vm477, %v286, %v450
        %v484 = vsel %vm477, %v297, %v451
        %v485 = vsel %vm477, %v298, %v452
        %v486 = vsel %vm477, %v331, %v461
        %v487 = vsel %vm477, %v332, %v462
        %v488 = vsel %vm477, %v341, %v463
        %v489 = vsel %vm477, %v342, %v464
        %v490 = vsel %vm477, %v381, %v469
        %v491 = vsel %vm477, %v382, %v470
        %v492 = vsel %vm477, %v393, %v471
        %v493 = vsel %vm477, %v394, %v472
        %v494 = vpack.c.bf16 %v482, %v478
        %v495 = vpack.c.bf16 %v483, %v479
        %v496 = vpack.c.bf16 %v484, %v480
        %v497 = vpack.c.bf16 %v485, %v481
        %v498 = vpack.c.bf16 %v490, %v486
        %v499 = vpack.c.bf16 %v491, %v487
        %v500 = vpack.c.bf16 %v492, %v488
        %v501 = vpack.c.bf16 %v493, %v489
        %v502 = vpack.c.bf16 %v423, %v423
        %v503 = vpack.c.bf16 %v424, %v424
        %v504 = vpack.c.bf16 %v435, %v435
        %v505 = vpack.c.bf16 %v436, %v436
        %v506 = vld [vmem:[#allocation2] sm:$0xf]
        %v507 = vld [vmem:[#allocation2 + $0x4] sm:$0xf]
        %v508 = vld [vmem:[#allocation2 + $0x8] sm:$0xf]
        %v509 = vld [vmem:[#allocation2 + $0xc] sm:$0xf]
        %v510 = vld [vmem:[%s2] sm:$0xff]
        %v511 = vld [vmem:[%s2 + $0x8] sm:$0xff]
        %v512 = vld [vmem:[%s2 + $0x10] sm:$0xff]
        %v513 = vld [vmem:[%s2 + $0x18] sm:$0xff]
        %515 = vset.pattern.permute.xlu0 0
        %516 = vperm.xlu0 %515, %v510
        %v517 = vpop.permute.xlu0 %516
        %520 = vset.pattern.permute.xlu0 0
        %521 = vperm.xlu0 %520, %v511
        %v522 = vpop.permute.xlu0 %521
        %525 = vset.pattern.permute.xlu0 0
        %526 = vperm.xlu0 %525, %v512
        %v527 = vpop.permute.xlu0 %526
        %530 = vset.pattern.permute.xlu0 0
        %531 = vperm.xlu0 %530, %v513
        %v532 = vpop.permute.xlu0 %531
        %v538 = vunpack.c.l.b16 %v506
        %v539 = vunpack.c.l.b16 %v507
        %v540 = vunpack.c.l.b16 %v508
        %v541 = vunpack.c.l.b16 %v509
        %v542 = vpack.c.b16 %v539, %v538
        %v543 = vpack.c.b16 %v541, %v540
        %vm544 = vcmask 293888
        %v546 = vsel %vm544, %v542, 0
        %v549 = vsel %vm544, %v543, 0
        %vm551 = vcmask 1041408
        %v553 = vsel %vm551, %v502, 0
        %v556 = vsel %vm551, %v503, 0
        %v559 = vsel %vm551, %v504, 0
        %v562 = vsel %vm551, %v505, 0
        %564 = vmatprep.subr.bf16.mxu0 %v495
        %565 = vmatpush1.bf16.msra.mxu0 %v494
        %566 = vmatprep.subr.bf16.mxu0 %v499
        %567 = vmatpush1.bf16.msra.mxu0 %v498
        %568 = vmatprep.subr.bf16.mxu0 %v556
        %569 = vmatpush1.bf16.msra.mxu0 %v553
        %570 = vmatprep.subr.bf16.mxu0 0
        %571 = vmatpush1.bf16.msra.mxu0 0
        %572 = vmatprep.subr.bf16.mxu0 0
        %573 = vmatpush1.bf16.msra.mxu0 0
        %574 = vmatprep.subr.bf16.mxu0 0
        %575 = vmatpush1.bf16.msra.mxu0 0
        %576 = vmatprep.subr.bf16.mxu0 0
        %577 = vmatpush1.bf16.msra.mxu0 0
        %578 = vmatprep.subr.bf16.mxu0 0
        %579 = vmatpush1.bf16.msra.mxu0 0
        %580 = vmatprep.subr.bf16.mxu0 0
        %581 = vmatpush1.bf16.msra.mxu0 0
        %582 = vmatprep.subr.bf16.mxu0 0
        %583 = vmatpush1.bf16.msra.mxu0 0
        %584 = vmatprep.subr.bf16.mxu0 0
        %585 = vmatpush1.bf16.msra.mxu0 0
        %586 = vmatprep.subr.bf16.mxu0 0
        %587 = vmatpush1.bf16.msra.mxu0 0
        %588 = vmatprep.subr.bf16.mxu0 0
        %589 = vmatpush1.bf16.msra.mxu0 0
        %590 = vmatprep.subr.bf16.mxu0 0
        %591 = vmatpush1.bf16.msra.mxu0 0
        %592 = vmatprep.subr.bf16.mxu0 0
        %593 = vmatpush1.bf16.msra.mxu0 0
        %594 = vmatprep.subr.bf16.mxu0 0
        %595 = vmatpush1.bf16.msra.mxu0 0
        %596 = vmatprep.mubr.bf16.mxu0 0
        %597 = vmatmul.mubr.bf16.gmra.mrb[0].mxu0 %v546
        %v598 = vpop.f32.mrb[0].mxu0
        %v599 = vadd.f32 %v517, %v598
        %v600 = vpop.f32.mrb[0].mxu0
        %v601 = vadd.f32 %v517, %v600
        %v602 = vpop.f32.mrb[0].mxu0
        %v603 = vadd.f32 %v522, %v602
        %v604 = vpop.f32.mrb[0].mxu0
        %v605 = vadd.f32 %v522, %v604
        %606 = vmatprep.mubr.bf16.mxu0 0
        %607 = vmatmul.mubr.bf16.gmra.mrb[0].mxu0 %v549
        %v608 = vpop.f32.mrb[0].mxu0
        %v609 = vadd.f32 %v527, %v608
        %v610 = vpop.f32.mrb[0].mxu0
        %v611 = vadd.f32 %v527, %v610
        %v612 = vpop.f32.mrb[0].mxu0
        %v613 = vadd.f32 %v532, %v612
        %v614 = vpop.f32.mrb[0].mxu0
        %v615 = vadd.f32 %v532, %v614
        %616 = vdwg.mxu0
        %617 = vmatprep.subr.bf16.mxu0 %v497
        %618 = vmatpush1.bf16.msra.mxu0 %v496
        %619 = vmatprep.subr.bf16.mxu0 %v501
        %620 = vmatpush1.bf16.msra.mxu0 %v500
        %621 = vmatprep.subr.bf16.mxu0 %v562
        %622 = vmatpush1.bf16.msra.mxu0 %v559
        %623 = vmatprep.subr.bf16.mxu0 0
        %624 = vmatpush1.bf16.msra.mxu0 0
        %625 = vmatprep.subr.bf16.mxu0 0
        %626 = vmatpush1.bf16.msra.mxu0 0
        %627 = vmatprep.subr.bf16.mxu0 0
        %628 = vmatpush1.bf16.msra.mxu0 0
        %629 = vmatprep.subr.bf16.mxu0 0
        %630 = vmatpush1.bf16.msra.mxu0 0
        %631 = vmatprep.subr.bf16.mxu0 0
        %632 = vmatpush1.bf16.msra.mxu0 0
        %633 = vmatprep.subr.bf16.mxu0 0
        %634 = vmatpush1.bf16.msra.mxu0 0
        %635 = vmatprep.subr.bf16.mxu0 0
        %636 = vmatpush1.bf16.msra.mxu0 0
        %637 = vmatprep.subr.bf16.mxu0 0
        %638 = vmatpush1.bf16.msra.mxu0 0
        %639 = vmatprep.subr.bf16.mxu0 0
        %640 = vmatpush1.bf16.msra.mxu0 0
        %641 = vmatprep.subr.bf16.mxu0 0
        %642 = vmatpush1.bf16.msra.mxu0 0
        %643 = vmatprep.subr.bf16.mxu0 0
        %644 = vmatpush1.bf16.msra.mxu0 0
        %645 = vmatprep.subr.bf16.mxu0 0
        %646 = vmatpush1.bf16.msra.mxu0 0
        %647 = vmatprep.subr.bf16.mxu0 0
        %648 = vmatpush1.bf16.msra.mxu0 0
        %649 = vmatprep.mubr.bf16.mxu0 0
        %650 = vmatmul.mubr.bf16.gmra.mrb[0].mxu0 %v546
        %v651 = vpop.f32.mrb[0].mxu0
        %v652 = vadd.f32 %v517, %v651
        %v653 = vpop.f32.mrb[0].mxu0
        %v654 = vadd.f32 %v517, %v653
        %v655 = vpop.f32.mrb[0].mxu0
        %v656 = vadd.f32 %v522, %v655
        %v657 = vpop.f32.mrb[0].mxu0
        %v658 = vadd.f32 %v522, %v657
        %659 = vmatprep.mubr.bf16.mxu0 0
        %660 = vmatmul.mubr.bf16.gmra.mrb[0].mxu0 %v549
        %v661 = vpop.f32.mrb[0].mxu0
        %v662 = vadd.f32 %v527, %v661
        %v663 = vpop.f32.mrb[0].mxu0
        %v664 = vadd.f32 %v527, %v663
        %v665 = vpop.f32.mrb[0].mxu0
        %v666 = vadd.f32 %v532, %v665
        %v667 = vpop.f32.mrb[0].mxu0
        %v668 = vadd.f32 %v532, %v667
        %669 = vdwg.mxu0
        %670 = vst [vmem:[%s181] sm:$0xff] %v599
        %671 = vst [vmem:[%s181 + $0x8] sm:$0xff] %v601
        %672 = vst [vmem:[%s181 + $0x10] sm:$0xff] %v603
        %673 = vst [vmem:[%s181 + $0x18] sm:$0xff] %v605
        %674 = vst [vmem:[%s181 + $0x20] sm:$0xff] %v609
        %675 = vst [vmem:[%s181 + $0x28] sm:$0xff] %v611
        %676 = vst [vmem:[%s181 + $0x30] sm:$0xff] %v613
        %677 = vst [vmem:[%s181 + $0x38] sm:$0xff] %v615
        %s678 = scalar_lea.vmem %s181, 64 [#allocation5]
        %679 = vst [vmem:[%s678] sm:$0xff] %v652
        %680 = vst [vmem:[%s678 + $0x8] sm:$0xff] %v654
        %681 = vst [vmem:[%s678 + $0x10] sm:$0xff] %v656
        %682 = vst [vmem:[%s678 + $0x18] sm:$0xff] %v658
        %683 = vst [vmem:[%s678 + $0x20] sm:$0xff] %v662
        %684 = vst [vmem:[%s678 + $0x28] sm:$0xff] %v664
        %685 = vst [vmem:[%s678 + $0x30] sm:$0xff] %v666
        %686 = vst [vmem:[%s678 + $0x38] sm:$0xff] %v668
        %s687 = sand.u32 %s94, 1
        %s688 = scalar_lea.sflag [#allocation4], %s687
        %s689 = sand.u32 %s94, 1
        %s690 = smul.addr %s689, 128
        %s691 = scalar_lea.vmem [#allocation5], %s690
        // Predicated region
        $region37: #{tpu_custom_call.1} parent=31 // pred_check
          %p692 = pneg %p104
        $region38: #{tpu_custom_call.1} parent=31 // pred_check_branch
          %694 = sbr.rel (%p692) target = $region40
        $region39: #{tpu_custom_call.1} parent=31 // pred_region
          %s695 = smul.u32 2, %s18
          %s697 = ssub.s32 2048, 2048
          %698 = vsyncadd %s688, %s697
          %s699 = smul.addr %s695, 8
          %s700 = smul.addr %s699, 128
          %s701 = scalar_lea.hbm %s3, %s700
          %s702 = sshll.u32 %s691, 4
          %s703 = int_to_ptr.vmem [resolvable:$true] %s702
          %708 = dma.vmem_to_hbm [thread:$0]  %s703, 2048, %s701, %s688, 256, 256, 16
        $region40: #{tpu_custom_call.1} parent=31 // pred_fallthru
          _
      $region32: #{tpu_custom_call.1} parent=5 // pred_fallthru
        _
      %p709 = scmp.le.s32.totalorder 2, %s13
      // Predicated region
      $region41: #{tpu_custom_call.1} parent=5 // pred_check
        %p710 = pneg %p709
      $region42: #{tpu_custom_call.1} parent=5 // pred_check_branch
        %712 = sbr.rel (%p710) target = $region44
      $region43: #{tpu_custom_call.1} parent=5 // pred_region
        %s713 = ssub.s32 %s13, 2
        // Predicated region
        $region45: #{tpu_custom_call.1} parent=43 // pred_check
          %p714 = pneg %p110
        $region46: #{tpu_custom_call.1} parent=43 // pred_check_branch
          %716 = sbr.rel (%p714) target = $region48
        $region47: #{tpu_custom_call.1} parent=43 // pred_region
          %s717 = sand.u32 %s95, 1
          %s718 = scalar_lea.sflag [#allocation4], %s717
          %s719 = sand.u32 %s95, 1
          %s720 = smul.addr %s719, 128
          %s721 = scalar_lea.vmem [#allocation5], %s720
          %722 = dma.done %s718, 2048
        $region48: #{tpu_custom_call.1} parent=43 // pred_fallthru
          _
      $region44: #{tpu_custom_call.1} parent=5 // pred_fallthru
        _
    $region6: #{tpu_custom_call.1} parent=1 // loop_footer
      %s17 = sadd.s32 1, %s13
    $region7: #{tpu_custom_call.1} parent=1 // loop_footer_branch
      %12 = sbr.rel target = $region3
    $region8: #{tpu_custom_call.1} parent=1 // loop_exit
      _
    %723 = vsyncpa [#allocation3], 1
    %s724 = scalar_lea.sflag [#allocation3], 1
    %725 = vsyncpa %s724, 1
    %726 = vsyncpa [#allocation4], 1
    %s727 = scalar_lea.sflag [#allocation4], 1
    %728 = vsyncpa %s727, 1

</llo_original>
